<compile_context>
chip_gen: v7x
topology: tpu7x:2x2x1
jax: 0.10.0
libtpu: 0.0.40
codegen_flags: <defaults>
</compile_context>

<pallas_src>
import math

import jax
import jax.numpy as jnp
from jax.experimental import pallas as pl
from jax.experimental.pallas import tpu as pltpu

OBS_DIM = 4      # env.observation_space.shape[0] for CartPole-v1
HIDDEN = 32
N_ACTIONS = 2    # env.action_space.n for CartPole-v1

# Packed-parameter column layout (shape (HIDDEN, 8)):
#   cols 0..3 : w1^T               (HIDDEN, OBS_DIM)
#   col  4    : b1                 (HIDDEN,)
#   col  5    : wd = (w2[:,1]-w2[:,0]) / T
#   col  6    : bd = (b2[1]-b2[0]) / T      (only row 0 meaningful)
#   col  7    : padding
_COL_B1 = OBS_DIM
_COL_WD = OBS_DIM + 1
_COL_BD = OBS_DIM + 2


def pmodel_kernel(x_ref, p_ref, o_ref):
    """One batch tile, feature-major (batch on lanes).

    x_ref: (OBS_DIM, tb) f32     -- transposed observations
    p_ref: (HIDDEN, 8)  f32      -- packed, temperature-folded parameters
    o_ref: (N_ACTIONS, tb) f32   -- [p(action 0); p(action 1)] rows
    """
    xT = x_ref[...]                       # (OBS_DIM, tb)
    P = p_ref[...]                        # (HIDDEN, 8)

    b1c = P[:, _COL_B1:_COL_B1 + 1]       # (HIDDEN, 1)  lane-broadcast column
    wdc = P[:, _COL_WD:_COL_WD + 1]       # (HIDDEN, 1)
    bd = P[0:1, _COL_BD:_COL_BD + 1]      # (1, 1)

    # fc1 + ReLU: K=4 contraction unrolled as VPU broadcast-FMAs
    # (column-broadcast of w1^T[:,k] x sublane-broadcast of x^T[k,:]).
    h = b1c + P[:, 0:1] * xT[0:1, :]
    h = h + P[:, 1:2] * xT[1:2, :]
    h = h + P[:, 2:3] * xT[2:3, :]
    h = h + P[:, 3:4] * xT[3:4, :]
    h = jnp.maximum(h, 0.0)               # (HIDDEN, tb)

    # fc2 logit difference d = wd . h + bd (contraction over the 32 sublanes):
    # VPU tree-add of the four vreg-aligned 8-sublane groups, then a single
    # small XLU sublane reduce 8 -> 1.
    t = h * wdc                                               # (HIDDEN, tb)
    s = t[0:8, :] + t[8:16, :] + t[16:24, :] + t[24:32, :]    # (8, tb)  VPU
    d = jnp.sum(s, axis=0, keepdims=True) + bd                # (1, tb)  XLU

    # 2-class softmax == sigmoid of the logit difference; exact via one EUP
    # tanh, so probabilities stay in [0, 1] and sum to 1.
    t5 = 0.5 * jnp.tanh(0.5 * d)                              # (1, tb)
    o_ref[0:1, :] = (0.5 - t5).astype(o_ref.dtype)            # p(action 0)
    o_ref[1:2, :] = (0.5 + t5).astype(o_ref.dtype)            # p(action 1)


def fold_params(w1, b1, w2, b2, temperature=1.0):
    """One-time constant fold: temperature + 2-class reduction of fc2, and
    packing of all resident parameters into a single (HIDDEN, 8) array.

    w1: (OBS_DIM, HIDDEN), b1: (HIDDEN,), w2: (HIDDEN, N_ACTIONS), b2: (N_ACTIONS,)
    """
    assert N_ACTIONS == 2, "sigmoid collapse hard-codes a 2-action head"
    assert w2.shape == (HIDDEN, N_ACTIONS) and b2.shape[-1] == N_ACTIONS
    inv_t = 1.0 / float(temperature)
    wd = (w2[:, 1] - w2[:, 0]) * inv_t                        # (HIDDEN,)
    bd = (b2[..., 1] - b2[..., 0]) * inv_t                    # scalar

    P = jnp.zeros((HIDDEN, 8), jnp.float32)
    P = P.at[:, 0:OBS_DIM].set(jnp.asarray(w1, jnp.float32).T)
    P = P.at[:, _COL_B1].set(jnp.asarray(b1, jnp.float32).reshape(-1))
    P = P.at[:, _COL_WD].set(wd.astype(jnp.float32))
    P = P.at[0, _COL_BD].set(jnp.asarray(bd, jnp.float32).reshape(()))
    return P


def _round_up(n, m):
    return ((n + m - 1) // m) * m


def pmodel_forward(x, packed_params, *, block_b=16384):
    """x: (B, OBS_DIM) f32; packed_params: (HIDDEN, 8) from fold_params.
    Returns (B, N_ACTIONS) action probabilities."""
    assert N_ACTIONS == 2
    B = x.shape[0]
    xT = jnp.asarray(x, jnp.float32).T                        # (OBS_DIM, B) lane-dense

    if B <= 256:
        # Single full-batch block; last block dim == full array dim is legal.
        tb = B
    else:
        # Lane-aligned (multiple of 128) tiles, capped at ~ceil(B/2) so the
        # "parallel" grid axis has >= 2 steps and both v7x TensorCores work.
        tb = min(block_b, _round_up(pl.cdiv(B, 2), 128))
        tb = max(tb, 128)
    grid = (pl.cdiv(B, tb),)
    # NOTE: for B not a multiple of tb the final partial tile computes on
    # padded lanes; tanh saturates (no Inf/NaN blow-up) and only the in-bounds
    # region is written back.

    outT = pl.pallas_call(
        pmodel_kernel,
        out_shape=jax.ShapeDtypeStruct((N_ACTIONS, B), jnp.float32),
        grid=grid,
        in_specs=[
            pl.BlockSpec((OBS_DIM, tb), lambda i: (0, i)),    # x^T: batch-tiled
            pl.BlockSpec((HIDDEN, 8), lambda i: (0, 0)),      # packed params: resident
        ],
        out_specs=pl.BlockSpec((N_ACTIONS, tb), lambda i: (0, i)),
        compiler_params=pltpu.CompilerParams(
            dimension_semantics=("parallel",)),
    )(xT, packed_params)

    return outT.T                                             # (B, N_ACTIONS)


def init_params(key):
    """Deterministic init mimicking torch.nn.Linear default (uniform +/-1/sqrt(fan_in))."""
    k1, k2, k3, k4 = jax.random.split(key, 4)
    bound1 = 1.0 / math.sqrt(OBS_DIM)
    bound2 = 1.0 / math.sqrt(HIDDEN)
    w1 = jax.random.uniform(k1, (OBS_DIM, HIDDEN), jnp.float32, -bound1, bound1)
    b1 = jax.random.uniform(k2, (HIDDEN,), jnp.float32, -bound1, bound1)
    w2 = jax.random.uniform(k3, (HIDDEN, N_ACTIONS), jnp.float32, -bound2, bound2)
    b2 = jax.random.uniform(k4, (N_ACTIONS,), jnp.float32, -bound2, bound2)
    return w1, b1, w2, b2


# TODO(synk): the Adam optimizer / save / load parts of PModel are training &
# checkpoint state, not part of the forward pass, and are not translated.

if __name__ == "__main__":
    key = jax.random.PRNGKey(0)
    kx, kp = jax.random.split(key)
    B = 8
    x = jax.random.normal(kx, (B, OBS_DIM), dtype=jnp.float32)
    w1, b1, w2, b2 = init_params(kp)

    temperature = 1.0
    packed = fold_params(w1, b1, w2, b2, temperature)   # one-time param prep

    out = pmodel_forward(x, packed)
    out = jax.block_until_ready(out)

    # sanity check against a plain-JAX reference of the original module
    h_ref = jnp.maximum(x @ w1 + b1, 0.0)
    logits_ref = (h_ref @ w2 + b2) / temperature
    ref = jax.nn.softmax(logits_ref, axis=-1)
    assert out.shape == (B, N_ACTIONS)
    assert jnp.allclose(out, ref, atol=5e-5, rtol=5e-5), (out, ref)
    assert jnp.allclose(jnp.sum(out, axis=-1), 1.0, atol=1e-6)
    assert bool(jnp.all(out >= 0.0)) and bool(jnp.all(out <= 1.0))

    print("KERNEL_OK")
</pallas_src>

<mosaic_0001>
module attributes {stable_mosaic.version = 11 : i64} {
  func.func @pmodel_kernel(%arg0: i32, %arg1: memref<4x8xf32, #tpu.memory_space<vmem>>, %arg2: memref<32x8xf32, #tpu.memory_space<vmem>>, %arg3: memref<2x8xf32, #tpu.memory_space<vmem>>) attributes {dimension_semantics = [#tpu.dimension_semantics<parallel>], iteration_bounds = array<i64: 1>, scalar_prefetch = 0 : i64, scratch_operands = 0 : i64, tpu.core_type = #tpu.core_type<tc>, window_params = [{transform_indices = @transform_0, window_bounds = array<i64: 4, 8>}, {pipeline_mode = #tpu.pipeline_mode<synchronous>, transform_indices = @transform_1, window_bounds = array<i64: 32, 8>}, {transform_indices = @transform_2, window_bounds = array<i64: 2, 8>}]} {
    %c0 = arith.constant 0 : index
    %c0_0 = arith.constant 0 : index
    %0 = vector.load %arg1[%c0, %c0_0] : memref<4x8xf32, #tpu.memory_space<vmem>>, vector<4x8xf32>
    %c0_1 = arith.constant 0 : index
    %c0_2 = arith.constant 0 : index
    %1 = vector.load %arg2[%c0_1, %c0_2] : memref<32x8xf32, #tpu.memory_space<vmem>>, vector<32x8xf32>
    %2 = vector.extract_strided_slice %1 {offsets = [0, 4], sizes = [32, 1], strides = [1, 1]} : vector<32x8xf32> to vector<32x1xf32>
    %3 = vector.extract_strided_slice %1 {offsets = [0, 5], sizes = [32, 1], strides = [1, 1]} : vector<32x8xf32> to vector<32x1xf32>
    %4 = vector.extract_strided_slice %1 {offsets = [0, 6], sizes = [1, 1], strides = [1, 1]} : vector<32x8xf32> to vector<1x1xf32>
    %5 = vector.extract_strided_slice %1 {offsets = [0, 0], sizes = [32, 1], strides = [1, 1]} : vector<32x8xf32> to vector<32x1xf32>
    %6 = vector.extract_strided_slice %0 {offsets = [0, 0], sizes = [1, 8], strides = [1, 1]} : vector<4x8xf32> to vector<1x8xf32>
    %7 = vector.broadcast %5 : vector<32x1xf32> to vector<32x8xf32>
    %8 = vector.broadcast %6 : vector<1x8xf32> to vector<32x8xf32>
    %9 = arith.mulf %7, %8 : vector<32x8xf32>
    %10 = vector.broadcast %2 : vector<32x1xf32> to vector<32x8xf32>
    %11 = arith.addf %10, %9 : vector<32x8xf32>
    %12 = vector.extract_strided_slice %1 {offsets = [0, 1], sizes = [32, 1], strides = [1, 1]} : vector<32x8xf32> to vector<32x1xf32>
    %13 = vector.extract_strided_slice %0 {offsets = [1, 0], sizes = [1, 8], strides = [1, 1]} : vector<4x8xf32> to vector<1x8xf32>
    %14 = vector.broadcast %12 : vector<32x1xf32> to vector<32x8xf32>
    %15 = vector.broadcast %13 : vector<1x8xf32> to vector<32x8xf32>
    %16 = arith.mulf %14, %15 : vector<32x8xf32>
    %17 = arith.addf %11, %16 : vector<32x8xf32>
    %18 = vector.extract_strided_slice %1 {offsets = [0, 2], sizes = [32, 1], strides = [1, 1]} : vector<32x8xf32> to vector<32x1xf32>
    %19 = vector.extract_strided_slice %0 {offsets = [2, 0], sizes = [1, 8], strides = [1, 1]} : vector<4x8xf32> to vector<1x8xf32>
    %20 = vector.broadcast %18 : vector<32x1xf32> to vector<32x8xf32>
    %21 = vector.broadcast %19 : vector<1x8xf32> to vector<32x8xf32>
    %22 = arith.mulf %20, %21 : vector<32x8xf32>
    %23 = arith.addf %17, %22 : vector<32x8xf32>
    %24 = vector.extract_strided_slice %1 {offsets = [0, 3], sizes = [32, 1], strides = [1, 1]} : vector<32x8xf32> to vector<32x1xf32>
    %25 = vector.extract_strided_slice %0 {offsets = [3, 0], sizes = [1, 8], strides = [1, 1]} : vector<4x8xf32> to vector<1x8xf32>
    %26 = vector.broadcast %24 : vector<32x1xf32> to vector<32x8xf32>
    %27 = vector.broadcast %25 : vector<1x8xf32> to vector<32x8xf32>
    %28 = arith.mulf %26, %27 : vector<32x8xf32>
    %29 = arith.addf %23, %28 : vector<32x8xf32>
    %cst = arith.constant 0.000000e+00 : f32
    %30 = vector.broadcast %cst : f32 to vector<32x8xf32>
    %31 = arith.maximumf %29, %30 : vector<32x8xf32>
    %32 = vector.broadcast %3 : vector<32x1xf32> to vector<32x8xf32>
    %33 = arith.mulf %31, %32 : vector<32x8xf32>
    %34 = vector.extract_strided_slice %33 {offsets = [0, 0], sizes = [8, 8], strides = [1, 1]} : vector<32x8xf32> to vector<8x8xf32>
    %35 = vector.extract_strided_slice %33 {offsets = [8, 0], sizes = [8, 8], strides = [1, 1]} : vector<32x8xf32> to vector<8x8xf32>
    %36 = arith.addf %34, %35 : vector<8x8xf32>
    %37 = vector.extract_strided_slice %33 {offsets = [16, 0], sizes = [8, 8], strides = [1, 1]} : vector<32x8xf32> to vector<8x8xf32>
    %38 = arith.addf %36, %37 : vector<8x8xf32>
    %39 = vector.extract_strided_slice %33 {offsets = [24, 0], sizes = [8, 8], strides = [1, 1]} : vector<32x8xf32> to vector<8x8xf32>
    %40 = arith.addf %38, %39 : vector<8x8xf32>
    %cst_3 = arith.constant dense<0.000000e+00> : vector<8xf32>
    %41 = vector.multi_reduction <add>, %40, %cst_3 [0] : vector<8x8xf32> to vector<8xf32>
    %42 = vector.shape_cast %41 : vector<8xf32> to vector<1x8xf32>
    %43 = vector.broadcast %4 : vector<1x1xf32> to vector<1x8xf32>
    %44 = arith.addf %42, %43 : vector<1x8xf32>
    %cst_4 = arith.constant 5.000000e-01 : f32
    %45 = vector.broadcast %cst_4 : f32 to vector<1x8xf32>
    %46 = arith.mulf %45, %44 : vector<1x8xf32>
    %47 = math.tanh %46 : vector<1x8xf32>
    %cst_5 = arith.constant 5.000000e-01 : f32
    %48 = vector.broadcast %cst_5 : f32 to vector<1x8xf32>
    %49 = arith.mulf %48, %47 : vector<1x8xf32>
    %cst_6 = arith.constant 5.000000e-01 : f32
    %50 = vector.broadcast %cst_6 : f32 to vector<1x8xf32>
    %51 = arith.subf %50, %49 : vector<1x8xf32>
    %c0_7 = arith.constant 0 : index
    %c0_8 = arith.constant 0 : index
    %52 = vector.load %arg3[%c0_7, %c0_8] : memref<2x8xf32, #tpu.memory_space<vmem>>, vector<1x8xf32>
    tpu.vector_store %arg3[%c0_7, %c0_8], %51 {strides = array<i32>} : memref<2x8xf32, #tpu.memory_space<vmem>>, vector<1x8xf32>,
    %cst_9 = arith.constant 5.000000e-01 : f32
    %53 = vector.broadcast %cst_9 : f32 to vector<1x8xf32>
    %54 = arith.addf %53, %49 : vector<1x8xf32>
    %c1 = arith.constant 1 : index
    %c0_10 = arith.constant 0 : index
    %55 = vector.load %arg3[%c1, %c0_10] : memref<2x8xf32, #tpu.memory_space<vmem>>, vector<1x8xf32>
    tpu.vector_store %arg3[%c1, %c0_10], %54 {strides = array<i32>} : memref<2x8xf32, #tpu.memory_space<vmem>>, vector<1x8xf32>,
    return
  }
  func.func @transform_0(%arg0: i32) -> (i32, i32) {
    %c0_i32 = arith.constant 0 : i32
    %c0_i32_0 = arith.constant 0 : i32
    return %c0_i32, %arg0 : i32, i32
  }
  func.func @transform_1(%arg0: i32) -> (i32, i32) {
    %c0_i32 = arith.constant 0 : i32
    %c0_i32_0 = arith.constant 0 : i32
    %c0_i32_1 = arith.constant 0 : i32
    return %c0_i32, %c0_i32_0 : i32, i32
  }
  func.func @transform_2(%arg0: i32) -> (i32, i32) {
    %c0_i32 = arith.constant 0 : i32
    %c0_i32_0 = arith.constant 0 : i32
    return %c0_i32, %arg0 : i32, i32
  }
}

</mosaic_0001>

<llo_original>
// kernel: tpu_custom_call.1
$region0: #{tpu_custom_call.1}
  #allocation0 [shape = 'u32[]', space=smem, size = 0x4, offset = 0x4, fixed_abs, tag = 'smem constant byte address 0x4 - core index']
  #allocation1 [shape = 'u32[144,128]{1,0:T(1,128)}', space=vmem, size = 0x12000, scoped, tag = 'internal scratch']
  %s0 = inlined_call_operand.vmem [shape: f32[4,8], index: 0, kind: input, shape index: {}]
  %s1 = inlined_call_operand.vmem [shape: f32[32,8], index: 1, kind: input, shape index: {}]
  %s2 = inlined_call_operand.hbm [shape: f32[2,8], index: 2, kind: output, shape index: {}]
  %s3 = sld [smem:[#allocation0]]
  $region18: #{tpu_custom_call.1} parent=0
    _
  %s5 = ssub.s32 1, %s3
  %s6 = scalar_select 0, %s5, %s3
  $region1: #{tpu_custom_call.1} parent=0
    #allocation2 [shape = 'u8[1024]{0}', space=vmem, size = 0x400, scoped, tag = 'output window, operand 0, single buffered']
    #allocation3 [shape = 's32[1]{0}', space=sflag, size = 0x4, scoped, tag = 'scoped memory for tpu_custom_call.1']
    %7 = vsyncpa [#allocation3], 0
    // Predicated region
    $region2: #{tpu_custom_call.1} parent=1 // pred_check
      _
    $region3: #{tpu_custom_call.1} parent=1 // pred_check_branch
      %9 = sbr.rel (0) target = $region5
    $region4: #{tpu_custom_call.1} parent=1 // pred_region
      _
    $region5: #{tpu_custom_call.1} parent=1 // pred_fallthru
      _
    // Predicated region
    $region6: #{tpu_custom_call.1} parent=1 // pred_check
      _
    $region7: #{tpu_custom_call.1} parent=1 // pred_check_branch
      %11 = sbr.rel (0) target = $region9
    $region8: #{tpu_custom_call.1} parent=1 // pred_region
      _
    $region9: #{tpu_custom_call.1} parent=1 // pred_fallthru
      _
    %v12 = vld [vmem:[%s0] sm:$0xf]
    %v13 = vld [vmem:[%s1] sm:$0xff]
    %v14 = vld [vmem:[%s1 + $0x8] sm:$0xff]
    %v15 = vld [vmem:[%s1 + $0x10] sm:$0xff]
    %v16 = vld [vmem:[%s1 + $0x18] sm:$0xff]
    %18 = vset.pattern.permute.xlu0 0
    %19 = vperm.xlu0 %18, %v13
    %v20 = vpop.permute.xlu0 %19
    %23 = vset.pattern.permute.xlu0 0
    %24 = vperm.xlu0 %23, %v14
    %v25 = vpop.permute.xlu0 %24
    %28 = vset.pattern.permute.xlu0 0
    %29 = vperm.xlu0 %28, %v15
    %v30 = vpop.permute.xlu0 %29
    %33 = vset.pattern.permute.xlu0 0
    %34 = vperm.xlu0 %33, %v16
    %v35 = vpop.permute.xlu0 %34
    %v37 = vlaneseq
    %v38 = vshrl.u32 %v37, 7
    %v39 = vsub.s32 0, %v38
    %v40 = vrot.slane %v12, %v39
    %v41 = vmul.f32 %v20, %v40
    %v42 = vmul.f32 %v25, %v40
    %v43 = vmul.f32 %v30, %v40
    %v44 = vmul.f32 %v35, %v40
    %45 = vset.pattern.permute.xlu0 4
    %46 = vperm.xlu0 %45, %v13
    %v47 = vpop.permute.xlu0 %46
    %49 = vset.pattern.permute.xlu0 4
    %50 = vperm.xlu0 %49, %v14
    %v51 = vpop.permute.xlu0 %50
    %53 = vset.pattern.permute.xlu0 4
    %54 = vperm.xlu0 %53, %v15
    %v55 = vpop.permute.xlu0 %54
    %57 = vset.pattern.permute.xlu0 4
    %58 = vperm.xlu0 %57, %v16
    %v59 = vpop.permute.xlu0 %58
    %v61 = vadd.f32 %v47, %v41
    %v62 = vadd.f32 %v51, %v42
    %v63 = vadd.f32 %v55, %v43
    %v64 = vadd.f32 %v59, %v44
    %65 = vset.pattern.permute.xlu0 1
    %66 = vperm.xlu0 %65, %v13
    %v67 = vpop.permute.xlu0 %66
    %69 = vset.pattern.permute.xlu0 1
    %70 = vperm.xlu0 %69, %v14
    %v71 = vpop.permute.xlu0 %70
    %73 = vset.pattern.permute.xlu0 1
    %74 = vperm.xlu0 %73, %v15
    %v75 = vpop.permute.xlu0 %74
    %77 = vset.pattern.permute.xlu0 1
    %78 = vperm.xlu0 %77, %v16
    %v79 = vpop.permute.xlu0 %78
    %v81 = vlaneseq
    %v82 = vshrl.u32 %v81, 7
    %v83 = vsub.s32 1, %v82
    %v84 = vrot.slane %v12, %v83
    %v85 = vmul.f32 %v67, %v84
    %v86 = vmul.f32 %v71, %v84
    %v87 = vmul.f32 %v75, %v84
    %v88 = vmul.f32 %v79, %v84
    %v89 = vadd.f32 %v61, %v85
    %v90 = vadd.f32 %v62, %v86
    %v91 = vadd.f32 %v63, %v87
    %v92 = vadd.f32 %v64, %v88
    %93 = vset.pattern.permute.xlu0 2
    %94 = vperm.xlu0 %93, %v13
    %v95 = vpop.permute.xlu0 %94
    %97 = vset.pattern.permute.xlu0 2
    %98 = vperm.xlu0 %97, %v14
    %v99 = vpop.permute.xlu0 %98
    %101 = vset.pattern.permute.xlu0 2
    %102 = vperm.xlu0 %101, %v15
    %v103 = vpop.permute.xlu0 %102
    %105 = vset.pattern.permute.xlu0 2
    %106 = vperm.xlu0 %105, %v16
    %v107 = vpop.permute.xlu0 %106
    %v109 = vlaneseq
    %v110 = vshrl.u32 %v109, 7
    %v111 = vsub.s32 2, %v110
    %v112 = vrot.slane %v12, %v111
    %v113 = vmul.f32 %v95, %v112
    %v114 = vmul.f32 %v99, %v112
    %v115 = vmul.f32 %v103, %v112
    %v116 = vmul.f32 %v107, %v112
    %v117 = vadd.f32 %v89, %v113
    %v118 = vadd.f32 %v90, %v114
    %v119 = vadd.f32 %v91, %v115
    %v120 = vadd.f32 %v92, %v116
    %121 = vset.pattern.permute.xlu0 3
    %122 = vperm.xlu0 %121, %v13
    %v123 = vpop.permute.xlu0 %122
    %125 = vset.pattern.permute.xlu0 3
    %126 = vperm.xlu0 %125, %v14
    %v127 = vpop.permute.xlu0 %126
    %129 = vset.pattern.permute.xlu0 3
    %130 = vperm.xlu0 %129, %v15
    %v131 = vpop.permute.xlu0 %130
    %133 = vset.pattern.permute.xlu0 3
    %134 = vperm.xlu0 %133, %v16
    %v135 = vpop.permute.xlu0 %134
    %v137 = vlaneseq
    %v138 = vshrl.u32 %v137, 7
    %v139 = vsub.s32 3, %v138
    %v140 = vrot.slane %v12, %v139
    %v141 = vmul.f32 %v123, %v140
    %v142 = vmul.f32 %v127, %v140
    %v143 = vmul.f32 %v131, %v140
    %v144 = vmul.f32 %v135, %v140
    %v145 = vadd.f32 %v117, %v141
    %v146 = vadd.f32 %v118, %v142
    %v147 = vadd.f32 %v119, %v143
    %v148 = vadd.f32 %v120, %v144
    %v149 = vmax.f32 %v145, 0.0
    %v150 = vmax.f32 %v146, 0.0
    %v151 = vmax.f32 %v147, 0.0
    %v152 = vmax.f32 %v148, 0.0
    %153 = vset.pattern.permute.xlu0 5
    %154 = vperm.xlu0 %153, %v13
    %v155 = vpop.permute.xlu0 %154
    %157 = vset.pattern.permute.xlu0 5
    %158 = vperm.xlu0 %157, %v14
    %v159 = vpop.permute.xlu0 %158
    %161 = vset.pattern.permute.xlu0 5
    %162 = vperm.xlu0 %161, %v15
    %v163 = vpop.permute.xlu0 %162
    %165 = vset.pattern.permute.xlu0 5
    %166 = vperm.xlu0 %165, %v16
    %v167 = vpop.permute.xlu0 %166
    %v169 = vmul.f32 %v149, %v155
    %v170 = vmul.f32 %v150, %v159
    %v171 = vmul.f32 %v151, %v163
    %v172 = vmul.f32 %v152, %v167
    %v173 = vadd.f32 %v169, %v170
    %v174 = vadd.f32 %v173, %v171
    %v175 = vadd.f32 %v174, %v172
    %vm176 = vcmask 64512
    %v177 = vsel %vm176, %v175, 0.0
    %v178 = vrot.slane %v177, 4
    %v179 = vadd.f32 %v177, %v178
    %v180 = vrot.slane %v179, 2
    %v181 = vadd.f32 %v179, %v180
    %v182 = vrot.slane %v181, 1
    %v183 = vadd.f32 %v181, %v182
    %184 = vset.pattern.permute.xlu0 6
    %185 = vperm.xlu0 %184, %v13
    %v186 = vpop.permute.xlu0 %185
    %v188 = vadd.f32 %v183, %v186
    %v189 = vmul.f32 %v188, 0.5
    %v190 = vtanh.pop %v189
    %v191 = vmul.f32 %v190, 0.5
    %v192 = vsub.f32 0.5, %v191
    %vm193 = vcmask 57344
    %194 = vst.msk [vmem:[#allocation2] sm:$0x1] %vm193, %v192
    %v195 = vadd.f32 %v191, 0.5
    %196 = vst.msk [vmem:[#allocation2 + $0x1] sm:$0x1] %vm193, %v195
    // Predicated region
    $region10: #{tpu_custom_call.1} parent=1 // pred_check
      _
    $region11: #{tpu_custom_call.1} parent=1 // pred_check_branch
      %198 = sbr.rel (0) target = $region13
    $region12: #{tpu_custom_call.1} parent=1 // pred_region
      %s200 = ssub.s32 32, 32
      %201 = vsyncadd [#allocation3], %s200
      %s203 = sshll.u32 [#allocation2], 4
      %s204 = int_to_ptr.vmem [resolvable:$true] %s203
      %206 = dma.vmem_to_hbm [thread:$0]  %s204, 32, %s2, [#allocation3]
    $region13: #{tpu_custom_call.1} parent=1 // pred_fallthru
      _
    // Predicated region
    $region14: #{tpu_custom_call.1} parent=1 // pred_check
      _
    $region15: #{tpu_custom_call.1} parent=1 // pred_check_branch
      %208 = sbr.rel (0) target = $region17
    $region16: #{tpu_custom_call.1} parent=1 // pred_region
      %209 = dma.done [#allocation3], 32
    $region17: #{tpu_custom_call.1} parent=1 // pred_fallthru
      _
    %210 = vsyncpa [#allocation3], 1

</llo_original>
